<compile_context>
chip_gen: v7x
topology: tpu7x:2x2x1
jax: 0.10.0
libtpu: 0.0.40
codegen_flags: <defaults>
</compile_context>

<pallas_src>
import functools

import jax
import jax.numpy as jnp
import numpy as np
from jax.experimental import pallas as pl
from jax.experimental.pallas import tpu as pltpu


# Scoped-VMEM limit; re-derive for v7x (64 MiB physical) at large tiles.
_VMEM_LIMIT = 64 * 1024 * 1024


def _round_up(x, m):
    return ((x + m - 1) // m) * m


# ----------------------------------------------------------------------------
# 1) Embedding lookup: scalar-prefetch row gather (one table row per step).
#    The token ids live in SMEM and drive a data-dependent BlockSpec index_map;
#    only the selected (1, 1, D) row is DMA'd -- the table stays in HBM.
# ----------------------------------------------------------------------------
def _gather_kernel(ids_smem_ref, row_ref, o_ref):
    del ids_smem_ref  # only used by the index_maps
    o_ref[...] = row_ref[...]


def embed_lookup(ids_flat, table):
    """table[ids] row gather.  ids_flat: (M,) int32, table: (V, D) f32."""
    M = ids_flat.shape[0]
    V, D = table.shape
    tbl3 = table.reshape(V, 1, D)
    out = pl.pallas_call(
        _gather_kernel,
        out_shape=jax.ShapeDtypeStruct((M, 1, D), table.dtype),
        grid_spec=pltpu.PrefetchScalarGridSpec(
            num_scalar_prefetch=1,
            grid=(M,),
            in_specs=[pl.BlockSpec((1, 1, D), lambda i, ids: (ids[i], 0, 0))],
            out_specs=pl.BlockSpec((1, 1, D), lambda i, ids: (i, 0, 0))),
        compiler_params=pltpu.CompilerParams(
            dimension_semantics=("arbitrary",)),
    )(ids_flat.astype(jnp.int32), tbl3)
    return out.reshape(M, D)


# ----------------------------------------------------------------------------
# 2) Row-tiled, K-tiled linear layer: out = X @ W + b (W pre-transposed to
#    (K, N) and bf16-staged in the wrapper; activations cast to bf16 in-kernel;
#    f32 accumulator on the MXU).
# ----------------------------------------------------------------------------
def _linear_kernel(x_ref, w_ref, b_ref, o_ref, acc_ref, *, mxu_dtype):
    k = pl.program_id(1)

    @pl.when(k == 0)
    def _():
        acc_ref[...] = jnp.zeros_like(acc_ref)

    acc_ref[...] += jnp.dot(x_ref[...].astype(mxu_dtype), w_ref[...],
                            preferred_element_type=jnp.float32)

    @pl.when(k == pl.num_programs(1) - 1)
    def _():
        o_ref[...] = (acc_ref[...] + b_ref[...]).astype(o_ref.dtype)


def linear(x, w_t, b, *, mxu_dtype, row_tile=512, k_tile=512):
    """x: (M, K) f32, w_t: (K, N) already in mxu_dtype, b: (N,) -> (M, N) f32."""
    M, K = x.shape
    N = w_t.shape[1]
    tm = min(row_tile, _round_up(M, 8))
    Mp = _round_up(M, tm)
    tk = K if K <= k_tile else k_tile
    Kp = _round_up(K, tk)
    xp = jnp.pad(x, ((0, Mp - M), (0, Kp - K))) if (Mp != M or Kp != K) else x
    wp = jnp.pad(w_t, ((0, Kp - K), (0, 0))) if Kp != K else w_t
    b2 = b.reshape(1, N).astype(jnp.float32)
    cost = pl.CostEstimate(
        flops=2 * Mp * Kp * N, transcendentals=0,
        bytes_accessed=(xp.size * xp.dtype.itemsize
                        + wp.size * wp.dtype.itemsize + 4 * (Mp * N + N)))
    kernel = functools.partial(_linear_kernel, mxu_dtype=mxu_dtype)
    out = pl.pallas_call(
        kernel,
        out_shape=jax.ShapeDtypeStruct((Mp, N), jnp.float32),
        grid_spec=pltpu.PrefetchScalarGridSpec(
            num_scalar_prefetch=0,
            grid=(Mp // tm, Kp // tk),
            in_specs=[pl.BlockSpec((tm, tk), lambda i, k: (i, k)),
                      pl.BlockSpec((tk, N), lambda i, k: (k, 0)),
                      pl.BlockSpec((1, N), lambda i, k: (0, 0))],
            out_specs=pl.BlockSpec((tm, N), lambda i, k: (i, 0)),
            scratch_shapes=[pltpu.VMEM((tm, N), jnp.float32)]),
        compiler_params=pltpu.CompilerParams(
            dimension_semantics=("parallel", "arbitrary"),
            vmem_limit_bytes=_VMEM_LIMIT),
        cost_estimate=cost,
    )(xp, wp, b2)
    return out[:M]


# ----------------------------------------------------------------------------
# 3) GRU recurrence.  x_proj already holds X @ W_ih^T + b_ih for every step.
#    Forward and backward directions are interleaved inside ONE pallas_call.
# ----------------------------------------------------------------------------
def _gru_cell(h_prev, gx, wh_ref, bh_ref, t, lens, mxu_dtype):
    """One GRU step for one direction.  h_prev/gx f32, wh bf16 (H, 3H)."""
    H = h_prev.shape[1]
    gh = jnp.dot(h_prev.astype(mxu_dtype), wh_ref[...],
                 preferred_element_type=jnp.float32) + bh_ref[...]
    r = jax.nn.sigmoid(gx[:, :H] + gh[:, :H])
    z = jax.nn.sigmoid(gx[:, H:2 * H] + gh[:, H:2 * H])
    n = jnp.tanh(gx[:, 2 * H:] + r * gh[:, 2 * H:])
    h_new = (1.0 - z) * n + z * h_prev
    valid = t < lens                               # (B, 1) bool
    out = jnp.where(valid, h_new, 0.0)             # zero past length (packed)
    h_next = jnp.where(valid, h_new, h_prev)       # freeze state past length
    return out, h_next


def _bigru_kernel(xpf_ref, xpb_ref, whf_ref, whb_ref, bhf_ref, bhb_ref,
                  len_ref, of_ref, ob_ref, hf_ref, hb_ref, *, mxu_dtype):
    i = pl.program_id(0)
    T = pl.num_programs(0)

    @pl.when(i == 0)
    def _():
        hf_ref[...] = jnp.zeros_like(hf_ref)
        hb_ref[...] = jnp.zeros_like(hb_ref)

    lens = len_ref[...]
    out_f, h_f = _gru_cell(hf_ref[...], xpf_ref[0], whf_ref, bhf_ref,
                           i, lens, mxu_dtype)
    of_ref[0] = out_f.astype(of_ref.dtype)
    hf_ref[...] = h_f

    out_b, h_b = _gru_cell(hb_ref[...], xpb_ref[0], whb_ref, bhb_ref,
                           T - 1 - i, lens, mxu_dtype)
    ob_ref[0] = out_b.astype(ob_ref.dtype)
    hb_ref[...] = h_b


def _gru_kernel(xp_ref, wh_ref, bh_ref, len_ref, o_ref, h_ref, *, mxu_dtype):
    i = pl.program_id(0)

    @pl.when(i == 0)
    def _():
        h_ref[...] = jnp.zeros_like(h_ref)

    out, h = _gru_cell(h_ref[...], xp_ref[0], wh_ref, bh_ref, i,
                       len_ref[...], mxu_dtype)
    o_ref[0] = out.astype(o_ref.dtype)
    h_ref[...] = h


def gru_bidirectional(xpf, xpb, whf_t, whb_t, bhf, bhb, lengths, *, mxu_dtype):
    """Fused fwd+bwd recurrence.  xpf/xpb: (T, B, 3H) f32, wh*_t: (H, 3H)."""
    T, B, G = xpf.shape
    H = G // 3
    len2d = lengths.astype(jnp.int32).reshape(B, 1)
    const2d = lambda t: (0, 0)
    kernel = functools.partial(_bigru_kernel, mxu_dtype=mxu_dtype)
    out_f, out_b = pl.pallas_call(
        kernel,
        out_shape=(jax.ShapeDtypeStruct((T, B, H), jnp.float32),
                   jax.ShapeDtypeStruct((T, B, H), jnp.float32)),
        grid_spec=pltpu.PrefetchScalarGridSpec(
            num_scalar_prefetch=0,
            grid=(T,),
            in_specs=[pl.BlockSpec((1, B, G), lambda t: (t, 0, 0)),
                      pl.BlockSpec((1, B, G), lambda t: (T - 1 - t, 0, 0)),
                      pl.BlockSpec((H, G), const2d),
                      pl.BlockSpec((H, G), const2d),
                      pl.BlockSpec((1, G), const2d),
                      pl.BlockSpec((1, G), const2d),
                      pl.BlockSpec((B, 1), const2d)],
            out_specs=(pl.BlockSpec((1, B, H), lambda t: (t, 0, 0)),
                       pl.BlockSpec((1, B, H), lambda t: (T - 1 - t, 0, 0))),
            scratch_shapes=[pltpu.VMEM((B, H), jnp.float32),
                            pltpu.VMEM((B, H), jnp.float32)]),
        compiler_params=pltpu.CompilerParams(
            dimension_semantics=("arbitrary",),
            vmem_limit_bytes=_VMEM_LIMIT),
    )(xpf, xpb, whf_t, whb_t, bhf.reshape(1, G), bhb.reshape(1, G), len2d)
    return out_f, out_b


def gru_unidirectional(xp, wh_t, bh, lengths, *, mxu_dtype):
    T, B, G = xp.shape
    H = G // 3
    len2d = lengths.astype(jnp.int32).reshape(B, 1)
    kernel = functools.partial(_gru_kernel, mxu_dtype=mxu_dtype)
    out = pl.pallas_call(
        kernel,
        out_shape=jax.ShapeDtypeStruct((T, B, H), jnp.float32),
        grid_spec=pltpu.PrefetchScalarGridSpec(
            num_scalar_prefetch=0,
            grid=(T,),
            in_specs=[pl.BlockSpec((1, B, G), lambda t: (t, 0, 0)),
                      pl.BlockSpec((H, G), lambda t: (0, 0)),
                      pl.BlockSpec((1, G), lambda t: (0, 0)),
                      pl.BlockSpec((B, 1), lambda t: (0, 0))],
            out_specs=pl.BlockSpec((1, B, H), lambda t: (t, 0, 0)),
            scratch_shapes=[pltpu.VMEM((B, H), jnp.float32)]),
        compiler_params=pltpu.CompilerParams(
            dimension_semantics=("arbitrary",),
            vmem_limit_bytes=_VMEM_LIMIT),
    )(xp, wh_t, bh.reshape(1, G), len2d)
    return out


# ----------------------------------------------------------------------------
# 4) Bi-GRU direction average + l2norm.
# ----------------------------------------------------------------------------
def _combine_kernel(*refs, bidirectional, do_norm, eps):
    if bidirectional:
        f_ref, b_ref, o_ref = refs
        x = (f_ref[...] + b_ref[...]) * 0.5
    else:
        f_ref, o_ref = refs
        x = f_ref[...]
    if do_norm:
        norm = jnp.sqrt(jnp.sum(x * x, axis=-1, keepdims=True)) + eps
        x = x * pl.reciprocal(norm, approx=False)   # exact: parity with torch
    o_ref[...] = x.astype(o_ref.dtype)


def combine_l2norm(fwd, bwd, *, do_norm, eps=1e-8, row_tile=512):
    M, H = fwd.shape
    tm = min(row_tile, _round_up(M, 8))
    Mp = _round_up(M, tm)
    ins = [fwd] if bwd is None else [fwd, bwd]
    if Mp != M:
        ins = [jnp.pad(a, ((0, Mp - M), (0, 0))) for a in ins]
    kernel = functools.partial(_combine_kernel, bidirectional=bwd is not None,
                               do_norm=do_norm, eps=eps)
    out = pl.pallas_call(
        kernel,
        out_shape=jax.ShapeDtypeStruct((Mp, H), jnp.float32),
        grid_spec=pltpu.PrefetchScalarGridSpec(
            num_scalar_prefetch=0,
            grid=(Mp // tm,),
            in_specs=[pl.BlockSpec((tm, H), lambda i: (i, 0)) for _ in ins],
            out_specs=pl.BlockSpec((tm, H), lambda i: (i, 0))),
        compiler_params=pltpu.CompilerParams(
            dimension_semantics=("parallel",),
            vmem_limit_bytes=_VMEM_LIMIT),
    )(*ins)
    return out[:M]


# ----------------------------------------------------------------------------
# Full EncoderText forward.
# ----------------------------------------------------------------------------
def encoder_text_forward(ids, lengths, params, *, use_bi_gru=False,
                         no_txtnorm=False, eps=1e-8,
                         mxu_dtype=jnp.bfloat16):
    """ids: (B, T) int32, lengths: (B,) int32.  Returns ((B, T, H), lengths)."""
    B, T = ids.shape
    H = params["layers"][0][0]["w_hh"].shape[1]
    num_dirs = 2 if use_bi_gru else 1
    G = 3 * H

    # Time-major flattening so the recurrence sees contiguous (B, 3H) blocks.
    ids_tb = jnp.transpose(ids).reshape(T * B)
    layer_in = embed_lookup(ids_tb, params["embedding"])          # (T*B, D)

    dir_outs = None
    for layer_params in params["layers"]:
        if num_dirs == 2:
            pf, pb = layer_params
            # Fused input projection for BOTH directions: one GEMM over N=6H.
            w_cat = jnp.concatenate([pf["w_ih"].T, pb["w_ih"].T], axis=1)
            b_cat = jnp.concatenate([pf["b_ih"], pb["b_ih"]])
            xp = linear(layer_in, w_cat.astype(mxu_dtype), b_cat,
                        mxu_dtype=mxu_dtype)                      # (T*B, 6H)
            xpf = xp[:, :G].reshape(T, B, G)
            xpb = xp[:, G:].reshape(T, B, G)
            out_f, out_b = gru_bidirectional(
                xpf, xpb,
                pf["w_hh"].T.astype(mxu_dtype), pb["w_hh"].T.astype(mxu_dtype),
                pf["b_hh"], pb["b_hh"], lengths, mxu_dtype=mxu_dtype)
            dir_outs = [out_f.reshape(T * B, H), out_b.reshape(T * B, H)]
            layer_in = jnp.concatenate(dir_outs, axis=-1)
        else:
            p = layer_params[0]
            xp = linear(layer_in, p["w_ih"].T.astype(mxu_dtype), p["b_ih"],
                        mxu_dtype=mxu_dtype).reshape(T, B, G)
            out_f = gru_unidirectional(xp, p["w_hh"].T.astype(mxu_dtype),
                                       p["b_hh"], lengths, mxu_dtype=mxu_dtype)
            dir_outs = [out_f.reshape(T * B, H)]
            layer_in = dir_outs[0]

    fwd = dir_outs[0]
    bwd = dir_outs[1] if num_dirs == 2 else None
    if bwd is None and no_txtnorm:
        cap = fwd
    else:
        cap = combine_l2norm(fwd, bwd, do_norm=not no_txtnorm, eps=eps)
    # TODO(synk): fold this (T,B,H)->(B,T,H) relayout into the combine kernel.
    cap_emb = cap.reshape(T, B, H).transpose(1, 0, 2)             # (B, T, H)
    return cap_emb, lengths


# ----------------------------------------------------------------------------
# Pure-JAX f32 reference (mirrors torch: Embedding + packed GRU + avg + l2norm).
# ----------------------------------------------------------------------------
def _reference_forward(ids, lengths, params, *, use_bi_gru, no_txtnorm,
                       eps=1e-8):
    x = params["embedding"][ids]                                  # (B, T, D)
    B, T, _ = x.shape
    H = params["layers"][0][0]["w_hh"].shape[1]
    num_dirs = 2 if use_bi_gru else 1
    layer_in = x
    for layer_params in params["layers"]:
        outs = []
        for d in range(num_dirs):
            p = layer_params[d]
            h = jnp.zeros((B, H), jnp.float32)
            out = jnp.zeros((B, T, H), jnp.float32)
            order = range(T - 1, -1, -1) if d == 1 else range(T)
            for t in order:
                x_t = layer_in[:, t]
                gx = x_t @ p["w_ih"].T + p["b_ih"]
                gh = h @ p["w_hh"].T + p["b_hh"]
                r = jax.nn.sigmoid(gx[:, :H] + gh[:, :H])
                z = jax.nn.sigmoid(gx[:, H:2 * H] + gh[:, H:2 * H])
                n = jnp.tanh(gx[:, 2 * H:] + r * gh[:, 2 * H:])
                h_new = (1.0 - z) * n + z * h
                m = (t < lengths).astype(jnp.float32)[:, None]
                out = out.at[:, t].set(m * h_new)
                h = m * h_new + (1.0 - m) * h
            outs.append(out)
        layer_in = outs[0] if num_dirs == 1 else jnp.concatenate(outs, axis=-1)
    cap = ((layer_in[:, :, :H] + layer_in[:, :, H:]) / 2.0
           if use_bi_gru else layer_in)
    if not no_txtnorm:
        norm = jnp.sqrt(jnp.sum(cap ** 2, axis=-1, keepdims=True)) + eps
        cap = cap / norm
    return cap, lengths


if __name__ == "__main__":
    # Small shapes: batch=2, seq=8, vocab=64, word_dim=32, embed_size=32,
    # num_layers=1, use_bi_gru=True, no_txtnorm=False.
    batch, seq = 2, 8
    vocab, word_dim, embed_size = 64, 32, 32
    num_layers, use_bi_gru, no_txtnorm = 1, True, False
    num_dirs = 2 if use_bi_gru else 1

    key = jax.random.PRNGKey(0)
    key, k_emb, k_ids = jax.random.split(key, 3)

    # init_weights(): embedding uniform(-0.1, 0.1); GRU default uniform(-k, k).
    embedding = jax.random.uniform(k_emb, (vocab, word_dim),
                                   minval=-0.1, maxval=0.1, dtype=jnp.float32)
    kstd = 1.0 / np.sqrt(embed_size)
    layers = []
    for l in range(num_layers):
        in_dim = word_dim if l == 0 else embed_size * num_dirs
        dirs = []
        for _ in range(num_dirs):
            key, k1, k2, k3, k4 = jax.random.split(key, 5)
            dirs.append({
                "w_ih": jax.random.uniform(k1, (3 * embed_size, in_dim),
                                           minval=-kstd, maxval=kstd,
                                           dtype=jnp.float32),
                "b_ih": jax.random.uniform(k2, (3 * embed_size,),
                                           minval=-kstd, maxval=kstd,
                                           dtype=jnp.float32),
                "w_hh": jax.random.uniform(k3, (3 * embed_size, embed_size),
                                           minval=-kstd, maxval=kstd,
                                           dtype=jnp.float32),
                "b_hh": jax.random.uniform(k4, (3 * embed_size,),
                                           minval=-kstd, maxval=kstd,
                                           dtype=jnp.float32),
            })
        layers.append(dirs)
    params = {"embedding": embedding, "layers": layers}

    ids = jax.random.randint(k_ids, (batch, seq), 0, vocab, dtype=jnp.int32)
    lengths = jnp.array([8, 5], dtype=jnp.int32)   # sorted descending (packed)

    # Production path: bf16 MXU inputs, f32 accumulation/state.
    cap_emb, cap_len = encoder_text_forward(
        ids, lengths, params, use_bi_gru=use_bi_gru, no_txtnorm=no_txtnorm,
        mxu_dtype=jnp.bfloat16)
    cap_emb = jax.block_until_ready(cap_emb)

    ref_emb, _ = _reference_forward(
        ids, lengths, params, use_bi_gru=use_bi_gru, no_txtnorm=no_txtnorm)

    # Tolerance relaxed vs the pure-f32 path because matmuls use bf16 inputs.
    np.testing.assert_allclose(np.asarray(cap_emb), np.asarray(ref_emb),
                               rtol=2e-2, atol=2e-2)
    print("KERNEL_OK")
</pallas_src>

<mosaic_0001>
module attributes {stable_mosaic.version = 11 : i64} {
  func.func @_gather_kernel(%arg0: i32, %arg1: memref<16xi32, #tpu.memory_space<smem>>, %arg2: memref<1x1x32xf32, #tpu.memory_space<vmem>>, %arg3: memref<1x1x32xf32, #tpu.memory_space<vmem>>) attributes {dimension_semantics = [#tpu.dimension_semantics<arbitrary>], iteration_bounds = array<i64: 16>, scalar_prefetch = 1 : i64, scratch_operands = 0 : i64, tpu.core_type = #tpu.core_type<tc>, window_params = [{transform_indices = @transform_0, window_bounds = array<i64: 1, 1, 32>}, {transform_indices = @transform_1, window_bounds = array<i64: 1, 1, 32>}]} {
    %c0 = arith.constant 0 : index
    %c0_0 = arith.constant 0 : index
    %c0_1 = arith.constant 0 : index
    %0 = vector.load %arg2[%c0, %c0_0, %c0_1] : memref<1x1x32xf32, #tpu.memory_space<vmem>>, vector<1x1x32xf32>
    %c0_2 = arith.constant 0 : index
    %c0_3 = arith.constant 0 : index
    %c0_4 = arith.constant 0 : index
    %1 = vector.load %arg3[%c0_2, %c0_3, %c0_4] : memref<1x1x32xf32, #tpu.memory_space<vmem>>, vector<1x1x32xf32>
    tpu.vector_store %arg3[%c0_2, %c0_3, %c0_4], %0 {strides = array<i32>} : memref<1x1x32xf32, #tpu.memory_space<vmem>>, vector<1x1x32xf32>,
    return
  }
  func.func @transform_0(%arg0: i32, %arg1: memref<16xi32, #tpu.memory_space<smem>>) -> (i32, i32, i32) {
    %0 = arith.index_cast %arg0 : i32 to index
    %1 = memref.load %arg1[%0] : memref<16xi32, #tpu.memory_space<smem>>
    %c0_i32 = arith.constant 0 : i32
    %c0_i32_0 = arith.constant 0 : i32
    %c0_i32_1 = arith.constant 0 : i32
    return %1, %c0_i32, %c0_i32_0 : i32, i32, i32
  }
  func.func @transform_1(%arg0: i32, %arg1: memref<16xi32, #tpu.memory_space<smem>>) -> (i32, i32, i32) {
    %c0_i32 = arith.constant 0 : i32
    %c0_i32_0 = arith.constant 0 : i32
    %c0_i32_1 = arith.constant 0 : i32
    return %arg0, %c0_i32, %c0_i32_0 : i32, i32, i32
  }
}

</mosaic_0001>

<llo_original>
// kernel: tpu_custom_call.1
$region0: #{tpu_custom_call.1}
  #allocation0 [shape = 'u32[]', space=smem, size = 0x4, offset = 0x4, fixed_abs, tag = 'smem constant byte address 0x4 - core index']
  #allocation1 [shape = 'u32[144,128]{1,0:T(1,128)}', space=vmem, size = 0x12000, scoped, tag = 'internal scratch']
  #allocation2 [shape = 's32[1]{0}', space=sflag, size = 0x4, scoped, tag = 'scoped memory for tpu_custom_call.1']
  #allocation3 [shape = 'u8[512]{0}', space=smem, size = 0x200, scoped, tag = 'prefetched SMEM operand 0']
  %s0 = inlined_call_operand.vmem [shape: s32[16], index: 0, kind: input, shape index: {}]
  %s1 = inlined_call_operand.vmem [shape: f32[64,1,32], index: 1, kind: input, shape index: {}]
  %s2 = inlined_call_operand.hbm [shape: f32[16,1,32], index: 2, kind: output, shape index: {}]
  %s3 = sld [smem:[#allocation0]]
  $region37: #{tpu_custom_call.1} parent=0
    _
  %s5 = ssub.s32 1, %s3
  %s6 = scalar_select 0, %s5, %s3
  %s7 = sshll.u32 %s0, 4
  %s8 = int_to_ptr.vmem [resolvable:$true] %s7
  %10 = dma.vmem_to_smem %s8, 16, [#allocation3], [#allocation2]
  %11 = dma.done [#allocation2], 16
  %12 = sfence
  $region1: #{tpu_custom_call.1} parent=0
    #allocation4 [shape = 'u8[1024]{0}', space=vmem, size = 0x400, scoped, tag = 'output window, operand 0']
    #allocation5 [shape = 's32[2]{0}', space=sflag, size = 0x8, scoped, tag = 'scoped memory for tpu_custom_call.1']
    %13 = vsyncpa [#allocation5], 0
    %s14 = scalar_lea.sflag [#allocation5], 1
    %15 = vsyncpa %s14, 0
    loop: start=0, step=1, limit=18
    $region2: #{tpu_custom_call.1} parent=1 // loop_pre_header
      _
    $region3: #{tpu_custom_call.1} parent=1 // loop_header
      %s17 = sphi 0, %s21
      %p18 = scmp.ge.s32.totalorder %s17, 18
      %s29 = sphi 0, %s31
      %s32 = sphi 0, %s29
      %s33 = sphi 0, %s32
      %s49 = sphi 0, %s33
      %s55 = sphi 0, %s57
      %s58 = sphi 0, %s55
      %s59 = sphi 0, %s58
      %s75 = sphi 0, %s59
    $region4: #{tpu_custom_call.1} parent=1 // loop_header_branch
      %20 = sbr.rel (%p18) target = $region8
    $region5: #{tpu_custom_call.1} parent=1 // loop_body
      %s22 = ssub.s32 %s17, 1
      %s23 = ssub.s32 %s17, 2
      %s24 = sadd.s32 %s17, 1
      %s25 = sld [smem:[#allocation3 + %s17]]
      %s26 = sld [smem:[#allocation3 + %s24]]
      %s27 = ssub.s32 %s25, %s26
      %p28 = scmp.eq.s32.totalorder %s27, 0
      %s30 = sadd.s32 %s29, 1
      %s31 = scalar_select %p28, %s29, %s30
      %p34 = pneg %p28
      %p35 = scmp.eq.s32.totalorder %s17, 15
      %p36 = por %p34, %p35
      %p37 = scmp.ne.s32.totalorder %s29, %s32
      %p38 = scmp.eq.s32.totalorder %s17, 0
      %p39 = por %p37, %p38
      %p40 = scmp.ne.s32.totalorder %s29, %s32
      %p41 = scmp.eq.s32.totalorder %s22, 15
      %p42 = por %p40, %p41
      %p43 = scmp.ne.s32.totalorder %s32, %s33
      %p44 = scmp.eq.s32.totalorder %s22, 0
      %p45 = por %p43, %p44
      %p46 = scmp.ne.s32.totalorder %s32, %s33
      %p47 = scmp.eq.s32.totalorder %s23, 15
      %p48 = por %p46, %p47
      %p50 = scmp.ne.s32.totalorder %s33, %s49
      %p51 = scmp.eq.s32.totalorder %s23, 0
      %p52 = por %p50, %p51
      %s53 = ssub.s32 %s17, %s24
      %p54 = scmp.eq.s32.totalorder %s53, 0
      %s56 = sadd.s32 %s55, 1
      %s57 = scalar_select %p54, %s55, %s56
      %p60 = pneg %p54
      %p61 = scmp.eq.s32.totalorder %s17, 15
      %p62 = por %p60, %p61
      %p63 = scmp.ne.s32.totalorder %s55, %s58
      %p64 = scmp.eq.s32.totalorder %s17, 0
      %p65 = por %p63, %p64
      %p66 = scmp.ne.s32.totalorder %s55, %s58
      %p67 = scmp.eq.s32.totalorder %s22, 15
      %p68 = por %p66, %p67
      %p69 = scmp.ne.s32.totalorder %s58, %s59
      %p70 = scmp.eq.s32.totalorder %s22, 0
      %p71 = por %p69, %p70
      %p72 = scmp.ne.s32.totalorder %s58, %s59
      %p73 = scmp.eq.s32.totalorder %s23, 15
      %p74 = por %p72, %p73
      %p76 = scmp.ne.s32.totalorder %s59, %s75
      %p77 = scmp.eq.s32.totalorder %s23, 0
      %p78 = por %p76, %p77
      %p79 = scmp.le.s32.totalorder 1, %s17
      %p80 = scmp.lt.s32.totalorder %s17, 17
      %p81 = pnand %p79, %p80
      %p82 = pneg %p81
      // Predicated region
      $region9: #{tpu_custom_call.1} parent=5 // pred_check
        _
      $region10: #{tpu_custom_call.1} parent=5 // pred_check_branch
        %84 = sbr.rel (%p81) target = $region12
      $region11: #{tpu_custom_call.1} parent=5 // pred_region
        %s85 = ssub.s32 %s17, 1
      $region12: #{tpu_custom_call.1} parent=5 // pred_fallthru
        _
      %p86 = scmp.lt.s32.totalorder %s17, 16
      // Predicated region
      $region13: #{tpu_custom_call.1} parent=5 // pred_check
        %p87 = pneg %p86
      $region14: #{tpu_custom_call.1} parent=5 // pred_check_branch
        %89 = sbr.rel (%p87) target = $region16
      $region15: #{tpu_custom_call.1} parent=5 // pred_region
        // Predicated region
        $region17: #{tpu_custom_call.1} parent=15 // pred_check
          %p90 = pneg %p39
        $region18: #{tpu_custom_call.1} parent=15 // pred_check_branch
          %92 = sbr.rel (%p90) target = $region20
        $region19: #{tpu_custom_call.1} parent=15 // pred_region
          %s93 = sld [smem:[#allocation3 + %s17]]
          %p94 = scmp.lt.s32.totalorder %s93, 63
          %s95 = scalar_select %p94, %s93, 63
          %s96 = scalar_lea.vmem %s1, %s95
          %s97 = sld [smem:[#allocation3 + %s17]]
        $region20: #{tpu_custom_call.1} parent=15 // pred_fallthru
          _
      $region16: #{tpu_custom_call.1} parent=5 // pred_fallthru
        _
      %p98 = scmp.le.s32.totalorder 1, %s17
      %p99 = scmp.lt.s32.totalorder %s17, 17
      %p100 = pnand %p98, %p99
      %p101 = pneg %p100
      // Predicated region
      $region21: #{tpu_custom_call.1} parent=5 // pred_check
        _
      $region22: #{tpu_custom_call.1} parent=5 // pred_check_branch
        %103 = sbr.rel (%p100) target = $region24
      $region23: #{tpu_custom_call.1} parent=5 // pred_region
        %s104 = ssub.s32 %s17, 1
        %s105 = sld [smem:[#allocation3 + %s22]]
        %p106 = scmp.lt.s32.totalorder %s105, 63
        %s107 = scalar_select %p106, %s105, 63
        %s108 = scalar_lea.vmem %s1, %s107
        %p109 = pneg %p45
        %p110 = pneg %p42
        %p111 = pneg %p71
        %p112 = pneg %p68
        %s113 = sand.u32 %s58, 1
        %s114 = scalar_lea.sflag [#allocation5], %s113
        %s115 = sand.u32 %s58, 1
        %s116 = scalar_lea.vmem [#allocation4], %s115
        %s117 = sld [smem:[#allocation3 + %s22]]
        %p118 = scmp.lt.s32.totalorder %s117, 63
        %s119 = scalar_select %p118, %s117, 63
        %s120 = scalar_lea.vmem %s1, %s119
        %s121 = sld [smem:[#allocation3 + %s22]]
        %v122 = vld [vmem:[%s120] sm:$0x1]
        %vm123 = vcmask 253952
        %124 = vst.msk [vmem:[%s116] sm:$0x1] %vm123, %v122
        %s125 = sand.u32 %s58, 1
        %s126 = scalar_lea.sflag [#allocation5], %s125
        %s127 = sand.u32 %s58, 1
        %s128 = scalar_lea.vmem [#allocation4], %s127
        // Predicated region
        $region25: #{tpu_custom_call.1} parent=23 // pred_check
          %p129 = pneg %p68
        $region26: #{tpu_custom_call.1} parent=23 // pred_check_branch
          %131 = sbr.rel (%p129) target = $region28
        $region27: #{tpu_custom_call.1} parent=23 // pred_region
          %s133 = ssub.s32 16, 16
          %134 = vsyncadd %s126, %s133
          %s135 = smul.addr %s22, 16
          %s136 = scalar_lea.hbm %s2, %s135
          %s138 = sshll.u32 %s128, 4
          %s139 = int_to_ptr.vmem [resolvable:$true] %s138
          %141 = dma.vmem_to_hbm [thread:$0]  %s139, 16, %s136, %s126
        $region28: #{tpu_custom_call.1} parent=23 // pred_fallthru
          _
      $region24: #{tpu_custom_call.1} parent=5 // pred_fallthru
        _
      %p142 = scmp.le.s32.totalorder 2, %s17
      // Predicated region
      $region29: #{tpu_custom_call.1} parent=5 // pred_check
        %p143 = pneg %p142
      $region30: #{tpu_custom_call.1} parent=5 // pred_check_branch
        %145 = sbr.rel (%p143) target = $region32
      $region31: #{tpu_custom_call.1} parent=5 // pred_region
        %s146 = ssub.s32 %s17, 2
        // Predicated region
        $region33: #{tpu_custom_call.1} parent=31 // pred_check
          %p147 = pneg %p74
        $region34: #{tpu_custom_call.1} parent=31 // pred_check_branch
          %149 = sbr.rel (%p147) target = $region36
        $region35: #{tpu_custom_call.1} parent=31 // pred_region
          %s150 = sand.u32 %s59, 1
          %s151 = scalar_lea.sflag [#allocation5], %s150
          %s152 = sand.u32 %s59, 1
          %s153 = scalar_lea.vmem [#allocation4], %s152
          %154 = dma.done %s151, 16
        $region36: #{tpu_custom_call.1} parent=31 // pred_fallthru
          _
      $region32: #{tpu_custom_call.1} parent=5 // pred_fallthru
        _
    $region6: #{tpu_custom_call.1} parent=1 // loop_footer
      %s21 = sadd.s32 1, %s17
    $region7: #{tpu_custom_call.1} parent=1 // loop_footer_branch
      %16 = sbr.rel target = $region3
    $region8: #{tpu_custom_call.1} parent=1 // loop_exit
      _
    %155 = vsyncpa [#allocation5], 1
    %s156 = scalar_lea.sflag [#allocation5], 1
    %157 = vsyncpa %s156, 1

</llo_original>
